<compile_context>
chip_gen: v5e
topology: v5e:2x2
jax: 0.10.0
libtpu: 0.0.40
codegen_flags: <defaults>
</compile_context>

<pallas_src>
import jax
import jax.numpy as jnp
from jax.experimental import pallas as pl
from jax.experimental.pallas import tpu as pltpu


def fused_mlp_kernel(x_ref, w12_ref, b12_ref, w34t_ref, b34_ref, o_ref):
    # Fused Linear1+Linear2: [bt, in] @ [in, 4h] -> f32 accumulator.
    h = jnp.dot(x_ref[...], w12_ref[...], preferred_element_type=jnp.float32)
    # Bias + ReLU in f32 on the VPU.
    h = jnp.maximum(h + b12_ref[...], 0.0)
    # Fused Linear3+Linear4 collapses to a single output column.  Compute it as
    # [1,4h] x [bt,4h]^T so the written block is lane-dense (1, bt) rather than
    # a masked (bt, 1) partial-store column.
    out_row = jax.lax.dot_general(
        w34t_ref[...], h.astype(w34t_ref.dtype),
        dimension_numbers=(((1,), (1,)), ((), ())),
        preferred_element_type=jnp.float32)
    o_ref[...] = out_row + b34_ref[0, 0]


def simple_net_forward(x, params, *, block_b=512, compute_dtype=jnp.bfloat16):
    """x: [B, input_size] f32. params: dict of (W, b) in PyTorch layout (out, in)."""
    B, in_features = x.shape
    (w1, b1), (w2, b2), (w3, b3), (w4, b4) = (
        params["l1"], params["l2"], params["l3"], params["l4"])

    # --- Exact algebraic fusion of the linear pairs (done once, in f32) ---
    w12 = w1.T @ w2.T                      # [in, 4h]
    b12 = b1 @ w2.T + b2                   # [4h]
    w34 = w3.T @ w4.T                      # [4h, 1]
    b34 = b3 @ w4.T + b4                   # [1]
    h4 = w12.shape[1]

    # --- Batch tiling (pad B to a multiple of the tile when gridded) ---
    if B <= block_b:
        bt, b_pad = B, B                   # single tile, full-array blocks
    else:
        bt = block_b                       # multiple of 128 -> lane-dense out block
        b_pad = ((B + bt - 1) // bt) * bt
    x_p = x if b_pad == B else jnp.pad(x, ((0, b_pad - B), (0, 0)))

    args = (
        x_p.astype(compute_dtype),                 # [b_pad, in]  (streamed per tile)
        w12.astype(compute_dtype),                 # [in, 4h]     (resident)
        b12[None, :].astype(jnp.float32),          # [1, 4h]      (resident, f32 add)
        w34.T.astype(compute_dtype),               # [1, 4h]      (resident, row form)
        b34.reshape(1, 1).astype(jnp.float32),     # [1, 1]       (SMEM scalar)
    )

    out = pl.pallas_call(
        fused_mlp_kernel,
        out_shape=jax.ShapeDtypeStruct((1, b_pad), jnp.float32),
        grid=(b_pad // bt,),
        in_specs=[
            pl.BlockSpec((bt, in_features), lambda i: (i, 0)),
            pl.BlockSpec((in_features, h4), lambda i: (0, 0)),
            pl.BlockSpec((1, h4), lambda i: (0, 0)),
            pl.BlockSpec((1, h4), lambda i: (0, 0)),
            pl.BlockSpec(memory_space=pltpu.MemorySpace.SMEM),
        ],
        out_specs=pl.BlockSpec((1, bt), lambda i: (0, i)),
        compiler_params=pltpu.CompilerParams(
            dimension_semantics=("parallel",)),
    )(*args)

    # Back to the module's (B, 1) layout; drop batch padding.
    return out[0, :B][:, None]


def init_params(key, input_size, hidden_size=32):
    """Deterministic init, same shapes as the PyTorch module (weight: [out, in])."""
    dims = [(input_size, hidden_size),
            (hidden_size, hidden_size * 4),
            (hidden_size * 4, hidden_size),
            (hidden_size, 1)]
    params = {}
    for i, (fan_in, fan_out) in enumerate(dims, start=1):
        key, kw, kb = jax.random.split(key, 3)
        bound = 1.0 / jnp.sqrt(fan_in)
        w = jax.random.uniform(kw, (fan_out, fan_in), jnp.float32, -bound, bound)
        b = jax.random.uniform(kb, (fan_out,), jnp.float32, -bound, bound)
        params[f"l{i}"] = (w, b)
    return params


def reference_forward(x, params):
    (w1, b1), (w2, b2), (w3, b3), (w4, b4) = (
        params["l1"], params["l2"], params["l3"], params["l4"])
    h = x @ w1.T + b1
    h = h @ w2.T + b2
    h = jnp.maximum(h, 0.0)
    h = h @ w3.T + b3
    return h @ w4.T + b4


if __name__ == "__main__":
    key = jax.random.PRNGKey(0)
    k_params, k_x1, k_x2 = jax.random.split(key, 3)

    input_size = 16
    hidden_size = 32
    params = init_params(k_params, input_size, hidden_size)

    # bf16 inputs/weights (f32 accumulation) -> compare to the f32 reference
    # with a bf16-appropriate tolerance.
    TOL = dict(atol=2e-2, rtol=2e-2)

    # Small batch: single-tile path.
    x_small = jax.random.normal(k_x1, (8, input_size), jnp.float32)
    out_small = jax.block_until_ready(simple_net_forward(x_small, params))
    ref_small = reference_forward(x_small, params)
    assert out_small.shape == (8, 1), out_small.shape
    assert jnp.allclose(out_small, ref_small, **TOL), (out_small, ref_small)

    # Larger, non-multiple batch: exercises the batch grid + padding path.
    x_big = jax.random.normal(k_x2, (1050, input_size), jnp.float32)
    out_big = jax.block_until_ready(simple_net_forward(x_big, params))
    ref_big = reference_forward(x_big, params)
    assert out_big.shape == (1050, 1), out_big.shape
    assert jnp.allclose(out_big, ref_big, **TOL), float(jnp.max(jnp.abs(out_big - ref_big)))

    print("KERNEL_OK")
</pallas_src>

<mosaic_0001>
module attributes {stable_mosaic.version = 11 : i64} {
  func.func @fused_mlp_kernel(%arg0: i32, %arg1: memref<8x16xbf16, #tpu.memory_space<vmem>>, %arg2: memref<16x128xbf16, #tpu.memory_space<vmem>>, %arg3: memref<1x128xf32, #tpu.memory_space<vmem>>, %arg4: memref<1x128xbf16, #tpu.memory_space<vmem>>, %arg5: memref<1x1xf32, #tpu.memory_space<smem>>, %arg6: memref<1x8xf32, #tpu.memory_space<vmem>>) attributes {dimension_semantics = [#tpu.dimension_semantics<parallel>], iteration_bounds = array<i64: 1>, scalar_prefetch = 0 : i64, scratch_operands = 0 : i64, tpu.core_type = #tpu.core_type<tc>, window_params = [{transform_indices = @transform_0, window_bounds = array<i64: 8, 16>}, {pipeline_mode = #tpu.pipeline_mode<synchronous>, transform_indices = @transform_1, window_bounds = array<i64: 16, 128>}, {pipeline_mode = #tpu.pipeline_mode<synchronous>, transform_indices = @transform_2, window_bounds = array<i64: 1, 128>}, {pipeline_mode = #tpu.pipeline_mode<synchronous>, transform_indices = @transform_3, window_bounds = array<i64: 1, 128>}, {transform_indices = @transform_4, window_bounds = array<i64: 1, 1>}, {transform_indices = @transform_5, window_bounds = array<i64: 1, 8>}]} {
    %c0 = arith.constant 0 : index
    %c0_0 = arith.constant 0 : index
    %0 = vector.load %arg1[%c0, %c0_0] : memref<8x16xbf16, #tpu.memory_space<vmem>>, vector<8x16xbf16>
    %c0_1 = arith.constant 0 : index
    %c0_2 = arith.constant 0 : index
    %1 = vector.load %arg2[%c0_1, %c0_2] : memref<16x128xbf16, #tpu.memory_space<vmem>>, vector<16x128xbf16>
    %cst = arith.constant dense<0.000000e+00> : vector<8x128xf32>
    %2 = tpu.matmul %0, %1, %cst {dimension_numbers = #tpu.dot_dimension_numbers<[1], [0], [0], [1], [0, 0, 1, 1], [], []>} : vector<8x16xbf16>, vector<16x128xbf16>, vector<8x128xf32> -> vector<8x128xf32>
    %c0_3 = arith.constant 0 : index
    %c0_4 = arith.constant 0 : index
    %3 = vector.load %arg3[%c0_3, %c0_4] : memref<1x128xf32, #tpu.memory_space<vmem>>, vector<1x128xf32>
    %4 = vector.broadcast %3 : vector<1x128xf32> to vector<8x128xf32>
    %5 = arith.addf %2, %4 : vector<8x128xf32>
    %cst_5 = arith.constant 0.000000e+00 : f32
    %6 = vector.broadcast %cst_5 : f32 to vector<8x128xf32>
    %7 = arith.maximumf %5, %6 : vector<8x128xf32>
    %c0_6 = arith.constant 0 : index
    %c0_7 = arith.constant 0 : index
    %8 = vector.load %arg4[%c0_6, %c0_7] : memref<1x128xbf16, #tpu.memory_space<vmem>>, vector<1x128xbf16>
    %9 = arith.truncf %7 : vector<8x128xf32> to vector<8x128xbf16>
    %cst_8 = arith.constant dense<0.000000e+00> : vector<1x8xf32>
    %10 = tpu.matmul %8, %9, %cst_8 {dimension_numbers = #tpu.dot_dimension_numbers<[1], [1], [0], [0], [0, 0, 1, 0], [], []>} : vector<1x128xbf16>, vector<8x128xbf16>, vector<1x8xf32> -> vector<1x8xf32>
    %c0_9 = arith.constant 0 : index
    %c0_10 = arith.constant 0 : index
    %11 = memref.load %arg5[%c0_9, %c0_10] : memref<1x1xf32, #tpu.memory_space<smem>>
    %12 = vector.broadcast %11 : f32 to vector<1x8xf32>
    %13 = arith.addf %10, %12 : vector<1x8xf32>
    %c0_11 = arith.constant 0 : index
    %c0_12 = arith.constant 0 : index
    %14 = vector.load %arg6[%c0_11, %c0_12] : memref<1x8xf32, #tpu.memory_space<vmem>>, vector<1x8xf32>
    tpu.vector_store %arg6[%c0_11, %c0_12], %13 {strides = array<i32>} : memref<1x8xf32, #tpu.memory_space<vmem>>, vector<1x8xf32>,
    return
  }
  func.func @transform_0(%arg0: i32) -> (i32, i32) {
    %c0_i32 = arith.constant 0 : i32
    %c0_i32_0 = arith.constant 0 : i32
    return %arg0, %c0_i32 : i32, i32
  }
  func.func @transform_1(%arg0: i32) -> (i32, i32) {
    %c0_i32 = arith.constant 0 : i32
    %c0_i32_0 = arith.constant 0 : i32
    %c0_i32_1 = arith.constant 0 : i32
    return %c0_i32, %c0_i32_0 : i32, i32
  }
  func.func @transform_2(%arg0: i32) -> (i32, i32) {
    %c0_i32 = arith.constant 0 : i32
    %c0_i32_0 = arith.constant 0 : i32
    %c0_i32_1 = arith.constant 0 : i32
    return %c0_i32, %c0_i32_0 : i32, i32
  }
  func.func @transform_3(%arg0: i32) -> (i32, i32) {
    %c0_i32 = arith.constant 0 : i32
    %c0_i32_0 = arith.constant 0 : i32
    %c0_i32_1 = arith.constant 0 : i32
    return %c0_i32, %c0_i32_0 : i32, i32
  }
  func.func @transform_4(%arg0: i32) -> (i32, i32) {
    %c0_i32 = arith.constant 0 : i32
    %c0_i32_0 = arith.constant 0 : i32
    %c0_i32_1 = arith.constant 0 : i32
    return %c0_i32, %c0_i32_0 : i32, i32
  }
  func.func @transform_5(%arg0: i32) -> (i32, i32) {
    %c0_i32 = arith.constant 0 : i32
    %c0_i32_0 = arith.constant 0 : i32
    return %c0_i32, %arg0 : i32, i32
  }
}

</mosaic_0001>

<llo_original>
// kernel: tpu_custom_call.1
$region0: #{tpu_custom_call.1}
  #allocation0 [shape = 'u32[]', space=smem, size = 0x4, offset = 0x4, fixed_abs, tag = 'smem constant byte address 0x4 - core index']
  #allocation1 [shape = 'u32[72,128]{1,0:T(1,128)}', space=vmem, size = 0x9000, scoped, tag = 'internal scratch']
  #allocation2 [shape = 'f32[1,1]{1,0:T(1,128)S(6)}', space=smem, size = 0x200, scoped, tag = 'scoped memory for tpu_custom_call.1']
  %s0 = inlined_call_operand.hbm [shape: bf16[8,16], index: 0, kind: input, shape index: {}]
  %s1 = inlined_call_operand.hbm [shape: bf16[16,128], index: 1, kind: input, shape index: {}]
  %s2 = inlined_call_operand.vmem [shape: f32[1,128], index: 2, kind: input, shape index: {}]
  %s3 = inlined_call_operand.vmem [shape: bf16[1,128], index: 3, kind: input, shape index: {}]
  %s4 = inlined_call_operand.<no memory space> [shape: f32[1,1], index: 4, kind: input, shape index: {}]
  %s5 = inlined_call_operand.hbm [shape: f32[1,8], index: 5, kind: output, shape index: {}]
  %s6 = sld [smem:[#allocation0]]
  $region38: #{tpu_custom_call.1} parent=0
    _
  %s8 = ssub.s32 1, %s6
  %s9 = scalar_select 0, %s8, %s6
  %10 = sst [smem:[#allocation2]] %s4
  $region1: #{tpu_custom_call.1} parent=0
    #allocation3 [shape = 'u8[2048]{0}', space=vmem, size = 0x800, scoped, tag = 'input window, operand 0, single buffered']
    #allocation4 [shape = 's32[1]{0}', space=sflag, size = 0x4, scoped, tag = 'scoped memory for tpu_custom_call.1']
    #allocation5 [shape = 's32[1]{0}', space=sflag, size = 0x4, scoped, tag = 'scoped memory for tpu_custom_call.1']
    #allocation6 [shape = 'u8[4096]{0}', space=vmem, size = 0x1000, scoped, tag = 'input window, operand 1, single buffered']
    #allocation7 [shape = 's32[1]{0}', space=sflag, size = 0x4, scoped, tag = 'scoped memory for tpu_custom_call.1']
    #allocation8 [shape = 'u8[512]{0}', space=vmem, size = 0x400, scoped, tag = 'output window, operand 0, single buffered']
    %11 = vsyncpa [#allocation4], 0
    %12 = vsyncpa [#allocation7], 0
    %13 = vsyncpa [#allocation5], 0
    // Predicated region
    $region2: #{tpu_custom_call.1} parent=1 // pred_check
      _
    $region3: #{tpu_custom_call.1} parent=1 // pred_check_branch
      %15 = sbr.rel (0) target = $region5
    $region4: #{tpu_custom_call.1} parent=1 // pred_region
      %17 = vsyncadd [#allocation4], 0
      %s19 = sshll.u32 %s0, 4
      %s20 = int_to_ptr.hbm [resolvable:$true] %s19
      %s21 = sshll.u32 [#allocation3], 4
      %s22 = int_to_ptr.vmem [resolvable:$true] %s21
      %24 = dma.hbm_to_vmem [thread:$0]  %s20, 64, %s22, [#allocation4]
    $region5: #{tpu_custom_call.1} parent=1 // pred_fallthru
      _
    // Predicated region
    $region6: #{tpu_custom_call.1} parent=1 // pred_check
      _
    $region7: #{tpu_custom_call.1} parent=1 // pred_check_branch
      %26 = sbr.rel (0) target = $region9
    $region8: #{tpu_custom_call.1} parent=1 // pred_region
      %28 = vsyncadd [#allocation7], 0
      %s29 = sshll.u32 %s1, 4
      %s30 = int_to_ptr.hbm [resolvable:$true] %s29
      %s31 = sshll.u32 [#allocation6], 4
      %s32 = int_to_ptr.vmem [resolvable:$true] %s31
      %37 = dma.hbm_to_vmem [thread:$0]  %s30, 128, %s32, [#allocation7], 64, 64, 4
    $region9: #{tpu_custom_call.1} parent=1 // pred_fallthru
      _
    // Predicated region
    $region10: #{tpu_custom_call.1} parent=1 // pred_check
      _
    $region11: #{tpu_custom_call.1} parent=1 // pred_check_branch
      %39 = sbr.rel (0) target = $region13
    $region12: #{tpu_custom_call.1} parent=1 // pred_region
      _
    $region13: #{tpu_custom_call.1} parent=1 // pred_fallthru
      _
    // Predicated region
    $region14: #{tpu_custom_call.1} parent=1 // pred_check
      _
    $region15: #{tpu_custom_call.1} parent=1 // pred_check_branch
      %41 = sbr.rel (0) target = $region17
    $region16: #{tpu_custom_call.1} parent=1 // pred_region
      _
    $region17: #{tpu_custom_call.1} parent=1 // pred_fallthru
      _
    // Predicated region
    $region18: #{tpu_custom_call.1} parent=1 // pred_check
      _
    $region19: #{tpu_custom_call.1} parent=1 // pred_check_branch
      %43 = sbr.rel (0) target = $region21
    $region20: #{tpu_custom_call.1} parent=1 // pred_region
      _
    $region21: #{tpu_custom_call.1} parent=1 // pred_fallthru
      _
    // Predicated region
    $region22: #{tpu_custom_call.1} parent=1 // pred_check
      _
    $region23: #{tpu_custom_call.1} parent=1 // pred_check_branch
      %45 = sbr.rel (0) target = $region25
    $region24: #{tpu_custom_call.1} parent=1 // pred_region
      %47 = dma.done [#allocation4], 64
    $region25: #{tpu_custom_call.1} parent=1 // pred_fallthru
      _
    // Predicated region
    $region26: #{tpu_custom_call.1} parent=1 // pred_check
      _
    $region27: #{tpu_custom_call.1} parent=1 // pred_check_branch
      %49 = sbr.rel (0) target = $region29
    $region28: #{tpu_custom_call.1} parent=1 // pred_region
      %51 = dma.done [#allocation7], 128
    $region29: #{tpu_custom_call.1} parent=1 // pred_fallthru
      _
    %v53 = vld [vmem:[#allocation3] sm:$0xf]
    %v54 = vld [vmem:[#allocation6] sm:$0xf]
    %v55 = vld [vmem:[#allocation6 + $0x4] sm:$0xf]
    %v56 = vld [vmem:[%s2] sm:$0x1]
    %v58 = vperm.slane %v56, 0
    %v62 = vunpack.c.l.b16 %v54
    %v63 = vunpack.c.l.b16 %v55
    %v64 = vpack.c.b16 %v63, %v62
    %vm66 = vcmask 130048
    %v68 = vsel %vm66, %v53, 0
    %70 = vmatpush.bf16.msra.mxu0 0
    %71 = vmatpush.bf16.msra.mxu0 0
    %72 = vmatpush.bf16.msra.mxu0 0
    %73 = vmatpush.bf16.msra.mxu0 0
    %74 = vmatpush.bf16.msra.mxu0 0
    %75 = vmatpush.bf16.msra.mxu0 0
    %76 = vmatpush.bf16.msra.mxu0 0
    %77 = vmatpush.bf16.msra.mxu0 %v64
    %78 = vmatmul.bf16.gmra.mxu0 %v68
    %v79 = vpop.f32.mrf.mxu0
    %v80 = vadd.f32 %v58, %v79
    %v81 = vpop.f32.mrf.mxu0
    %82 = vdwg.mxu0
    %v83 = vmax.f32 %v80, 0.0
    %v84 = vld [vmem:[%s3] sm:$0x1]
    %v85 = vpack.c.bf16 %v83, %v83
    %s86 = sld [smem:[#allocation2]]
    %v87 = vstv %s86
    %88 = vmatpush.bf16.xpose.msra.mxu0 0
    %89 = vmatpush.bf16.xpose.msra.mxu0 0
    %90 = vmatpush.bf16.xpose.msra.mxu0 0
    %91 = vmatpush.bf16.xpose.msra.mxu0 0
    %92 = vmatpush.bf16.xpose.msra.mxu0 0
    %93 = vmatpush.bf16.xpose.msra.mxu0 0
    %94 = vmatpush.bf16.xpose.msra.mxu0 0
    %95 = vmatpush.bf16.xpose.msra.mxu0 %v85
    %96 = vmatmul.bf16.gmra.mxu0 %v84
    %v97 = vpop.f32.mrf.mxu0
    %v98 = vadd.f32 %v87, %v97
    %v99 = vpop.f32.mrf.mxu0
    %100 = vdwg.mxu0
    %vm101 = vcmask 57344
    %102 = vst.msk [vmem:[#allocation8] sm:$0x1] %vm101, %v98
    // Predicated region
    $region30: #{tpu_custom_call.1} parent=1 // pred_check
      _
    $region31: #{tpu_custom_call.1} parent=1 // pred_check_branch
      %104 = sbr.rel (0) target = $region33
    $region32: #{tpu_custom_call.1} parent=1 // pred_region
      %106 = vsyncadd [#allocation5], 0
      %s108 = sshll.u32 [#allocation8], 4
      %s109 = int_to_ptr.vmem [resolvable:$true] %s108
      %s110 = sshll.u32 %s5, 4
      %s111 = int_to_ptr.hbm [resolvable:$true] %s110
      %113 = dma.vmem_to_hbm [thread:$0]  %s109, 16, %s111, [#allocation5]
    $region33: #{tpu_custom_call.1} parent=1 // pred_fallthru
      _
    // Predicated region
    $region34: #{tpu_custom_call.1} parent=1 // pred_check
      _
    $region35: #{tpu_custom_call.1} parent=1 // pred_check_branch
      %115 = sbr.rel (0) target = $region37
    $region36: #{tpu_custom_call.1} parent=1 // pred_region
      %117 = dma.done [#allocation5], 16
    $region37: #{tpu_custom_call.1} parent=1 // pred_fallthru
      _
    %118 = vsyncpa [#allocation4], 1
    %119 = vsyncpa [#allocation7], 1
    %120 = vsyncpa [#allocation5], 1

</llo_original>
